<compile_context>
chip_gen: v7x
topology: tpu7x:2x2x1
jax: 0.10.0
libtpu: 0.0.40
codegen_flags: <defaults>
</compile_context>

<pallas_src>
import functools

import jax
import jax.numpy as jnp
from jax.experimental import pallas as pl
from jax.experimental.pallas import tpu as pltpu


def _round_up(x, m):
    return ((x + m - 1) // m) * m


# ---------------------------------------------------------------------------
# Kernel
# ---------------------------------------------------------------------------
def lstm_step_kernel(xh_ref, c_ref, w_ref, b_ref, wout_ref, bout_ref,
                     out_ref, hn_ref, cn_ref):
    """One fused LSTMCell step + Linear head for one batch tile.

    xh_ref  : (TB, K_p)        concatenated [x | h], zero padded
    c_ref   : (TB, H_p)        previous cell state, zero padded
    w_ref   : (K_p, 4*H_p)     fused [W_ih^T ; W_hh^T], gate blocks [i,f,o,g]
    b_ref   : (1, 4*H_p)       b_ih + b_hh, same gate-block layout
    wout_ref: (H_p, O_p)       W_out^T, zero padded
    bout_ref: (1, O_p)         b_out, zero padded
    """
    xh = xh_ref[...]
    c = c_ref[...]

    # Single fused MXU contraction, f32 accumulation.
    gates = (jnp.dot(xh.astype(w_ref.dtype), w_ref[...],
                     preferred_element_type=jnp.float32)
             + b_ref[...])

    hp = hn_ref.shape[-1]  # padded hidden size (multiple of 128): aligned slices.

    # Gate blocks are laid out [i, f, o, g] -> one sigmoid over 3*hp lanes,
    # one tanh over the last hp lanes (fewer EUP dispatch sites).
    sig = jax.nn.sigmoid(gates[:, :3 * hp])
    i_g = sig[:, 0 * hp:1 * hp]
    f_g = sig[:, 1 * hp:2 * hp]
    o_g = sig[:, 2 * hp:3 * hp]
    g_g = jnp.tanh(gates[:, 3 * hp:4 * hp])

    c_next = f_g * c + i_g * g_g
    h_next = o_g * jnp.tanh(c_next)

    cn_ref[...] = c_next.astype(cn_ref.dtype)
    hn_ref[...] = h_next.astype(hn_ref.dtype)

    # Linear head (second MXU matmul), lane-dense padded output.
    out_ref[...] = (jnp.dot(h_next.astype(wout_ref.dtype), wout_ref[...],
                            preferred_element_type=jnp.float32)
                    + bout_ref[...]).astype(out_ref.dtype)


# ---------------------------------------------------------------------------
# Parameter preparation (one-time): fuse matmuls/biases, pad to lane-dense.
# ---------------------------------------------------------------------------
def prepare_params(params, weights_dtype=jnp.float32):
    """Fuse + zero-pad PyTorch-layout parameters for the Pallas kernel.

    weights_dtype=jnp.bfloat16 halves HBM weight traffic on v6e/v7x (gate math
    and accumulation stay f32); default f32 keeps bit-tight accuracy.
    """
    wih_t, whh_t, b_ih, b_hh, wout_t, b_out = params
    in_size = wih_t.shape[0]
    h = whh_t.shape[0]
    out_dim = wout_t.shape[1]

    in_p = _round_up(in_size, 128)
    h_p = _round_up(h, 128)
    out_p = _round_up(out_dim, 128)
    k_p = in_p + h_p

    # Padded gate-block order: [i, f, o, g] (source PyTorch order is i, f, g, o).
    # Gate block t occupies lane-aligned columns [t*h_p, t*h_p + h); all padding
    # is zero, so padded lanes yield c_next = h_next = 0 exactly.
    gate_src = (0, 1, 3, 2)   # padded block t <- source gate gate_src[t]
    b_sum = (b_ih + b_hh).astype(jnp.float32)

    w = jnp.zeros((k_p, 4 * h_p), weights_dtype)
    b = jnp.zeros((1, 4 * h_p), jnp.float32)
    for t, g in enumerate(gate_src):
        w = w.at[:in_size, t * h_p:t * h_p + h].set(
            wih_t[:, g * h:(g + 1) * h].astype(weights_dtype))
        w = w.at[in_p:in_p + h, t * h_p:t * h_p + h].set(
            whh_t[:, g * h:(g + 1) * h].astype(weights_dtype))
        b = b.at[:, t * h_p:t * h_p + h].set(b_sum[:, g * h:(g + 1) * h])

    wout = jnp.zeros((h_p, out_p), weights_dtype).at[:h, :out_dim].set(
        wout_t.astype(weights_dtype))
    bout = jnp.zeros((1, out_p), jnp.float32).at[:, :out_dim].set(
        b_out.astype(jnp.float32))

    return dict(w=w, b=b, wout=wout, bout=bout,
                in_size=in_size, h=h, out_dim=out_dim,
                in_p=in_p, h_p=h_p, out_p=out_p)


# ---------------------------------------------------------------------------
# Forward wrapper
# ---------------------------------------------------------------------------
def lstm_forward(x_cur, prep, h_cur=None, c_cur=None, *, block_b=256):
    """One LSTMCell step + Linear(lstm_size, 96), executed in a Pallas kernel."""
    b_log = x_cur.shape[0]
    in_size, h_log, out_dim = prep["in_size"], prep["h"], prep["out_dim"]
    in_p, h_p, out_p = prep["in_p"], prep["h_p"], prep["out_p"]
    k_p = in_p + h_p

    if h_cur is None:
        h_cur = jnp.zeros((b_log, h_log), jnp.float32)
    if c_cur is None:
        c_cur = jnp.zeros((b_log, h_log), jnp.float32)

    # Batch tile: multiple of 8 (f32 sublane), capped by block_b.
    tb = _round_up(min(block_b, _round_up(b_log, 8)), 8)
    b_pad = _round_up(max(b_log, tb), tb)
    grid = (b_pad // tb,)

    # Lane-dense fused input xh = [x | h] and padded cell state.
    xh = jnp.zeros((b_pad, k_p), jnp.float32)
    xh = xh.at[:b_log, :in_size].set(x_cur.astype(jnp.float32))
    xh = xh.at[:b_log, in_p:in_p + h_log].set(h_cur.astype(jnp.float32))
    c_in = jnp.zeros((b_pad, h_p), jnp.float32).at[:b_log, :h_log].set(
        c_cur.astype(jnp.float32))

    w, bias, wout, bout = prep["w"], prep["b"], prep["wout"], prep["bout"]

    # Working-set estimate (weights resident + double-buffered batch tiles).
    w_bytes = (w.size * w.dtype.itemsize + bias.size * 4
               + wout.size * wout.dtype.itemsize + bout.size * 4)
    tile_bytes = 4 * tb * (k_p + h_p + out_p + 2 * h_p)   # in + out tiles, f32
    vmem_need = w_bytes + 2 * tile_bytes + 4 * tb * 4 * h_p  # + gates temp
    vmem_limit = int(min(64 * 1024 * 1024, max(32 * 1024 * 1024, 2 * vmem_need)))

    cost = pl.CostEstimate(
        flops=2 * b_pad * k_p * 4 * h_p + 2 * b_pad * h_p * out_p,
        transcendentals=5 * b_pad * h_p,
        bytes_accessed=w_bytes + 4 * (xh.size + c_in.size
                                      + b_pad * (out_p + 2 * h_p)),
    )

    grid_spec = pltpu.PrefetchScalarGridSpec(
        num_scalar_prefetch=0,
        grid=grid,
        in_specs=[
            pl.BlockSpec((tb, k_p), lambda i: (i, 0)),        # xh  (batch-tiled)
            pl.BlockSpec((tb, h_p), lambda i: (i, 0)),        # c   (batch-tiled)
            pl.BlockSpec((k_p, 4 * h_p), lambda i: (0, 0)),   # fused gate weights
            pl.BlockSpec((1, 4 * h_p), lambda i: (0, 0)),     # fused bias
            pl.BlockSpec((h_p, out_p), lambda i: (0, 0)),     # head weights
            pl.BlockSpec((1, out_p), lambda i: (0, 0)),       # head bias
        ],
        out_specs=(
            pl.BlockSpec((tb, out_p), lambda i: (i, 0)),      # out
            pl.BlockSpec((tb, h_p), lambda i: (i, 0)),        # h_next
            pl.BlockSpec((tb, h_p), lambda i: (i, 0)),        # c_next
        ),
    )

    out_pad, h_pad_arr, c_pad_arr = pl.pallas_call(
        lstm_step_kernel,
        out_shape=(
            jax.ShapeDtypeStruct((b_pad, out_p), jnp.float32),
            jax.ShapeDtypeStruct((b_pad, h_p), jnp.float32),
            jax.ShapeDtypeStruct((b_pad, h_p), jnp.float32),
        ),
        grid_spec=grid_spec,
        compiler_params=pltpu.CompilerParams(
            dimension_semantics=("parallel",),
            vmem_limit_bytes=vmem_limit),
        cost_estimate=cost,
    )(xh, c_in, w, bias, wout, bout)

    out = out_pad[:b_log, :out_dim]
    h_next = h_pad_arr[:b_log, :h_log]
    c_next = c_pad_arr[:b_log, :h_log]
    return out, h_next, c_next


# ---------------------------------------------------------------------------
# Init + pure-JAX reference (PyTorch LSTMCell semantics)
# ---------------------------------------------------------------------------
def init_params(key, input_size, lstm_size, out_dim=96):
    """Deterministic init mirroring PyTorch's U(-1/sqrt(H), 1/sqrt(H)) scheme."""
    ks = jax.random.split(key, 6)
    k_lstm = 1.0 / jnp.sqrt(lstm_size)
    k_out = 1.0 / jnp.sqrt(lstm_size)
    wih_t = jax.random.uniform(ks[0], (input_size, 4 * lstm_size),
                               jnp.float32, -k_lstm, k_lstm)
    whh_t = jax.random.uniform(ks[1], (lstm_size, 4 * lstm_size),
                               jnp.float32, -k_lstm, k_lstm)
    b_ih = jax.random.uniform(ks[2], (1, 4 * lstm_size),
                              jnp.float32, -k_lstm, k_lstm)
    b_hh = jax.random.uniform(ks[3], (1, 4 * lstm_size),
                              jnp.float32, -k_lstm, k_lstm)
    wout_t = jax.random.uniform(ks[4], (lstm_size, out_dim),
                                jnp.float32, -k_out, k_out)
    b_out = jax.random.uniform(ks[5], (1, out_dim),
                               jnp.float32, -k_out, k_out)
    return wih_t, whh_t, b_ih, b_hh, wout_t, b_out


def reference_forward(x_cur, params, h_cur, c_cur):
    wih_t, whh_t, b_ih, b_hh, wout_t, b_out = params
    h = whh_t.shape[0]
    gates = x_cur @ wih_t + b_ih + h_cur @ whh_t + b_hh
    i_g = jax.nn.sigmoid(gates[:, 0 * h:1 * h])
    f_g = jax.nn.sigmoid(gates[:, 1 * h:2 * h])
    g_g = jnp.tanh(gates[:, 2 * h:3 * h])
    o_g = jax.nn.sigmoid(gates[:, 3 * h:4 * h])
    c_next = f_g * c_cur + i_g * g_g
    h_next = o_g * jnp.tanh(c_next)
    out = h_next @ wout_t + b_out
    return out, h_next, c_next


if __name__ == "__main__":
    key = jax.random.PRNGKey(0)
    k_x, k_p = jax.random.split(key)

    batch = 2
    input_size = 32
    lstm_size = 32

    x_cur = jax.random.normal(k_x, (batch, input_size), jnp.float32)
    params = init_params(k_p, input_size, lstm_size)
    prep = prepare_params(params, weights_dtype=jnp.float32)

    fwd = functools.partial(lstm_forward, prep=prep)
    out, h_next, c_next = fwd(x_cur)
    jax.block_until_ready((out, h_next, c_next))

    # sanity-check against pure-JAX reference
    h0 = jnp.zeros((batch, lstm_size), jnp.float32)
    c0 = jnp.zeros((batch, lstm_size), jnp.float32)
    out_ref, h_ref, c_ref = reference_forward(x_cur, params, h0, c0)
    assert out.shape == (batch, 96)
    assert h_next.shape == (batch, lstm_size)
    assert c_next.shape == (batch, lstm_size)
    assert jnp.allclose(out, out_ref, atol=1e-5), float(jnp.abs(out - out_ref).max())
    assert jnp.allclose(h_next, h_ref, atol=1e-5), float(jnp.abs(h_next - h_ref).max())
    assert jnp.allclose(c_next, c_ref, atol=1e-5), float(jnp.abs(c_next - c_ref).max())

    # also exercise the explicit (h, c) path, chaining one more step
    out2, h2, c2 = fwd(x_cur, h_cur=h_next, c_cur=c_next)
    jax.block_until_ready((out2, h2, c2))
    out2_ref, h2_ref, c2_ref = reference_forward(x_cur, params, h_ref, c_ref)
    assert jnp.allclose(out2, out2_ref, atol=1e-5)
    assert jnp.allclose(h2, h2_ref, atol=1e-5)
    assert jnp.allclose(c2, c2_ref, atol=1e-5)

    print("KERNEL_OK")
</pallas_src>

<mosaic_0001>
module attributes {stable_mosaic.version = 11 : i64} {
  func.func @lstm_step_kernel(%arg0: i32, %arg1: memref<8x256xf32, #tpu.memory_space<vmem>>, %arg2: memref<8x128xf32, #tpu.memory_space<vmem>>, %arg3: memref<256x512xf32, #tpu.memory_space<vmem>>, %arg4: memref<1x512xf32, #tpu.memory_space<vmem>>, %arg5: memref<128x128xf32, #tpu.memory_space<vmem>>, %arg6: memref<1x128xf32, #tpu.memory_space<vmem>>, %arg7: memref<8x128xf32, #tpu.memory_space<vmem>>, %arg8: memref<8x128xf32, #tpu.memory_space<vmem>>, %arg9: memref<8x128xf32, #tpu.memory_space<vmem>>) attributes {dimension_semantics = [#tpu.dimension_semantics<parallel>], iteration_bounds = array<i64: 1>, scalar_prefetch = 0 : i64, scratch_operands = 0 : i64, tpu.core_type = #tpu.core_type<tc>, window_params = [{transform_indices = @transform_0, window_bounds = array<i64: 8, 256>}, {transform_indices = @transform_1, window_bounds = array<i64: 8, 128>}, {pipeline_mode = #tpu.pipeline_mode<synchronous>, transform_indices = @transform_2, window_bounds = array<i64: 256, 512>}, {pipeline_mode = #tpu.pipeline_mode<synchronous>, transform_indices = @transform_3, window_bounds = array<i64: 1, 512>}, {pipeline_mode = #tpu.pipeline_mode<synchronous>, transform_indices = @transform_4, window_bounds = array<i64: 128, 128>}, {pipeline_mode = #tpu.pipeline_mode<synchronous>, transform_indices = @transform_5, window_bounds = array<i64: 1, 128>}, {transform_indices = @transform_6, window_bounds = array<i64: 8, 128>}, {transform_indices = @transform_7, window_bounds = array<i64: 8, 128>}, {transform_indices = @transform_8, window_bounds = array<i64: 8, 128>}]} {
    %c0 = arith.constant 0 : index
    %c0_0 = arith.constant 0 : index
    %0 = vector.load %arg1[%c0, %c0_0] : memref<8x256xf32, #tpu.memory_space<vmem>>, vector<8x256xf32>
    %c0_1 = arith.constant 0 : index
    %c0_2 = arith.constant 0 : index
    %1 = vector.load %arg2[%c0_1, %c0_2] : memref<8x128xf32, #tpu.memory_space<vmem>>, vector<8x128xf32>
    %c0_3 = arith.constant 0 : index
    %c0_4 = arith.constant 0 : index
    %2 = vector.load %arg3[%c0_3, %c0_4] : memref<256x512xf32, #tpu.memory_space<vmem>>, vector<256x512xf32>
    %cst = arith.constant dense<0.000000e+00> : vector<8x512xf32>
    %3 = tpu.matmul %0, %2, %cst {dimension_numbers = #tpu.dot_dimension_numbers<[1], [0], [0], [1], [0, 0, 1, 1], [], []>} : vector<8x256xf32>, vector<256x512xf32>, vector<8x512xf32> -> vector<8x512xf32>
    %c0_5 = arith.constant 0 : index
    %c0_6 = arith.constant 0 : index
    %4 = vector.load %arg4[%c0_5, %c0_6] : memref<1x512xf32, #tpu.memory_space<vmem>>, vector<1x512xf32>
    %5 = vector.broadcast %4 : vector<1x512xf32> to vector<8x512xf32>
    %6 = arith.addf %3, %5 : vector<8x512xf32>
    %7 = vector.extract_strided_slice %6 {offsets = [0, 0], sizes = [8, 384], strides = [1, 1]} : vector<8x512xf32> to vector<8x384xf32>
    %8 = arith.negf %7 : vector<8x384xf32>
    %9 = math.exp %8 : vector<8x384xf32>
    %cst_7 = arith.constant 1.000000e+00 : f32
    %10 = vector.broadcast %cst_7 : f32 to vector<8x384xf32>
    %11 = arith.addf %10, %9 : vector<8x384xf32>
    %12 = arith.divf %10, %11 : vector<8x384xf32>
    %13 = vector.extract_strided_slice %12 {offsets = [0, 0], sizes = [8, 128], strides = [1, 1]} : vector<8x384xf32> to vector<8x128xf32>
    %14 = vector.extract_strided_slice %12 {offsets = [0, 128], sizes = [8, 128], strides = [1, 1]} : vector<8x384xf32> to vector<8x128xf32>
    %15 = vector.extract_strided_slice %12 {offsets = [0, 256], sizes = [8, 128], strides = [1, 1]} : vector<8x384xf32> to vector<8x128xf32>
    %16 = vector.extract_strided_slice %6 {offsets = [0, 384], sizes = [8, 128], strides = [1, 1]} : vector<8x512xf32> to vector<8x128xf32>
    %17 = math.tanh %16 : vector<8x128xf32>
    %18 = arith.mulf %14, %1 : vector<8x128xf32>
    %19 = arith.mulf %13, %17 : vector<8x128xf32>
    %20 = arith.addf %18, %19 : vector<8x128xf32>
    %21 = math.tanh %20 : vector<8x128xf32>
    %22 = arith.mulf %15, %21 : vector<8x128xf32>
    %c0_8 = arith.constant 0 : index
    %c0_9 = arith.constant 0 : index
    %23 = vector.load %arg9[%c0_8, %c0_9] : memref<8x128xf32, #tpu.memory_space<vmem>>, vector<8x128xf32>
    tpu.vector_store %arg9[%c0_8, %c0_9], %20 {strides = array<i32>} : memref<8x128xf32, #tpu.memory_space<vmem>>, vector<8x128xf32>,
    %c0_10 = arith.constant 0 : index
    %c0_11 = arith.constant 0 : index
    %24 = vector.load %arg8[%c0_10, %c0_11] : memref<8x128xf32, #tpu.memory_space<vmem>>, vector<8x128xf32>
    tpu.vector_store %arg8[%c0_10, %c0_11], %22 {strides = array<i32>} : memref<8x128xf32, #tpu.memory_space<vmem>>, vector<8x128xf32>,
    %c0_12 = arith.constant 0 : index
    %c0_13 = arith.constant 0 : index
    %25 = vector.load %arg5[%c0_12, %c0_13] : memref<128x128xf32, #tpu.memory_space<vmem>>, vector<128x128xf32>
    %cst_14 = arith.constant dense<0.000000e+00> : vector<8x128xf32>
    %26 = tpu.matmul %22, %25, %cst_14 {dimension_numbers = #tpu.dot_dimension_numbers<[1], [0], [0], [1], [0, 0, 1, 1], [], []>} : vector<8x128xf32>, vector<128x128xf32>, vector<8x128xf32> -> vector<8x128xf32>
    %c0_15 = arith.constant 0 : index
    %c0_16 = arith.constant 0 : index
    %27 = vector.load %arg6[%c0_15, %c0_16] : memref<1x128xf32, #tpu.memory_space<vmem>>, vector<1x128xf32>
    %28 = vector.broadcast %27 : vector<1x128xf32> to vector<8x128xf32>
    %29 = arith.addf %26, %28 : vector<8x128xf32>
    %c0_17 = arith.constant 0 : index
    %c0_18 = arith.constant 0 : index
    %30 = vector.load %arg7[%c0_17, %c0_18] : memref<8x128xf32, #tpu.memory_space<vmem>>, vector<8x128xf32>
    tpu.vector_store %arg7[%c0_17, %c0_18], %29 {strides = array<i32>} : memref<8x128xf32, #tpu.memory_space<vmem>>, vector<8x128xf32>,
    return
  }
  func.func @transform_0(%arg0: i32) -> (i32, i32) {
    %c0_i32 = arith.constant 0 : i32
    %c0_i32_0 = arith.constant 0 : i32
    return %arg0, %c0_i32 : i32, i32
  }
  func.func @transform_1(%arg0: i32) -> (i32, i32) {
    %c0_i32 = arith.constant 0 : i32
    %c0_i32_0 = arith.constant 0 : i32
    return %arg0, %c0_i32 : i32, i32
  }
  func.func @transform_2(%arg0: i32) -> (i32, i32) {
    %c0_i32 = arith.constant 0 : i32
    %c0_i32_0 = arith.constant 0 : i32
    %c0_i32_1 = arith.constant 0 : i32
    return %c0_i32, %c0_i32_0 : i32, i32
  }
  func.func @transform_3(%arg0: i32) -> (i32, i32) {
    %c0_i32 = arith.constant 0 : i32
    %c0_i32_0 = arith.constant 0 : i32
    %c0_i32_1 = arith.constant 0 : i32
    return %c0_i32, %c0_i32_0 : i32, i32
  }
  func.func @transform_4(%arg0: i32) -> (i32, i32) {
    %c0_i32 = arith.constant 0 : i32
    %c0_i32_0 = arith.constant 0 : i32
    %c0_i32_1 = arith.constant 0 : i32
    return %c0_i32, %c0_i32_0 : i32, i32
  }
  func.func @transform_5(%arg0: i32) -> (i32, i32) {
    %c0_i32 = arith.constant 0 : i32
    %c0_i32_0 = arith.constant 0 : i32
    %c0_i32_1 = arith.constant 0 : i32
    return %c0_i32, %c0_i32_0 : i32, i32
  }
  func.func @transform_6(%arg0: i32) -> (i32, i32) {
    %c0_i32 = arith.constant 0 : i32
    %c0_i32_0 = arith.constant 0 : i32
    return %arg0, %c0_i32 : i32, i32
  }
  func.func @transform_7(%arg0: i32) -> (i32, i32) {
    %c0_i32 = arith.constant 0 : i32
    %c0_i32_0 = arith.constant 0 : i32
    return %arg0, %c0_i32 : i32, i32
  }
  func.func @transform_8(%arg0: i32) -> (i32, i32) {
    %c0_i32 = arith.constant 0 : i32
    %c0_i32_0 = arith.constant 0 : i32
    return %arg0, %c0_i32 : i32, i32
  }
}

</mosaic_0001>

<llo_original>
// kernel: tpu_custom_call.1
$region0: #{tpu_custom_call.1}
  #allocation0 [shape = 'u32[]', space=smem, size = 0x4, offset = 0x4, fixed_abs, tag = 'smem constant byte address 0x4 - core index']
  #allocation1 [shape = 'u32[144,128]{1,0:T(1,128)}', space=vmem, size = 0x12000, scoped, tag = 'internal scratch']
  %s0 = inlined_call_operand.hbm [shape: f32[8,256], index: 0, kind: input, shape index: {}]
  %s1 = inlined_call_operand.hbm [shape: f32[8,128], index: 1, kind: input, shape index: {}]
  %s2 = inlined_call_operand.hbm [shape: f32[256,512], index: 2, kind: input, shape index: {}]
  %s3 = inlined_call_operand.vmem [shape: f32[1,512], index: 3, kind: input, shape index: {}]
  %s4 = inlined_call_operand.hbm [shape: f32[128,128], index: 4, kind: input, shape index: {}]
  %s5 = inlined_call_operand.vmem [shape: f32[1,128], index: 5, kind: input, shape index: {}]
  %s6 = inlined_call_operand.hbm [shape: f32[8,128], index: 6, kind: output, shape index: {0}]
  %s7 = inlined_call_operand.hbm [shape: f32[8,128], index: 7, kind: output, shape index: {1}]
  %s8 = inlined_call_operand.hbm [shape: f32[8,128], index: 8, kind: output, shape index: {2}]
  %9 = xla_tuple %s6, %s7, %s8
  %s10 = sld [smem:[#allocation0]]
  $region66: #{tpu_custom_call.1} parent=0
    _
  %s12 = ssub.s32 1, %s10
  %s13 = scalar_select 0, %s12, %s10
  $region1: #{tpu_custom_call.1} parent=0
    #allocation2 [shape = 'u8[8192]{0}', space=vmem, size = 0x2000, scoped, tag = 'input window, operand 0, single buffered']
    #allocation3 [shape = 's32[1]{0}', space=sflag, size = 0x4, scoped, tag = 'scoped memory for tpu_custom_call.1']
    #allocation4 [shape = 's32[1]{0}', space=sflag, size = 0x4, scoped, tag = 'scoped memory for tpu_custom_call.1']
    #allocation5 [shape = 'u8[4096]{0}', space=vmem, size = 0x1000, scoped, tag = 'input window, operand 1, single buffered']
    #allocation6 [shape = 's32[1]{0}', space=sflag, size = 0x4, scoped, tag = 'scoped memory for tpu_custom_call.1']
    #allocation7 [shape = 'u8[524288]{0}', space=vmem, size = 0x80000, scoped, tag = 'input window, operand 2, single buffered']
    #allocation8 [shape = 'u8[65536]{0}', space=vmem, size = 0x10000, scoped, tag = 'input window, operand 4, single buffered']
    #allocation9 [shape = 's32[1]{0}', space=sflag, size = 0x4, scoped, tag = 'scoped memory for tpu_custom_call.1']
    #allocation10 [shape = 'u8[4096]{0}', space=vmem, size = 0x1000, scoped, tag = 'output window, operand 0, single buffered']
    #allocation11 [shape = 'u8[4096]{0}', space=vmem, size = 0x1000, scoped, tag = 'output window, operand 1, single buffered']
    #allocation12 [shape = 's32[1]{0}', space=sflag, size = 0x4, scoped, tag = 'scoped memory for tpu_custom_call.1']
    #allocation13 [shape = 'u8[4096]{0}', space=vmem, size = 0x1000, scoped, tag = 'output window, operand 2, single buffered']
    %14 = vsyncpa [#allocation3], 0
    %15 = vsyncpa [#allocation6], 0
    %16 = vsyncpa [#allocation9], 0
    %17 = vsyncpa [#allocation4], 0
    %18 = vsyncpa [#allocation12], 0
    // Predicated region
    $region2: #{tpu_custom_call.1} parent=1 // pred_check
      _
    $region3: #{tpu_custom_call.1} parent=1 // pred_check_branch
      %20 = sbr.rel (0) target = $region5
    $region4: #{tpu_custom_call.1} parent=1 // pred_region
      %s22 = ssub.s32 256, 256
      %23 = vsyncadd [#allocation3], %s22
      %s25 = sshll.u32 [#allocation2], 4
      %s26 = int_to_ptr.vmem [resolvable:$true] %s25
      %28 = dma.hbm_to_vmem [thread:$0]  %s0, 256, %s26, [#allocation3]
    $region5: #{tpu_custom_call.1} parent=1 // pred_fallthru
      _
    // Predicated region
    $region6: #{tpu_custom_call.1} parent=1 // pred_check
      _
    $region7: #{tpu_custom_call.1} parent=1 // pred_check_branch
      %30 = sbr.rel (0) target = $region9
    $region8: #{tpu_custom_call.1} parent=1 // pred_region
      %s32 = ssub.s32 128, 128
      %33 = vsyncadd [#allocation6], %s32
      %s35 = sshll.u32 [#allocation5], 4
      %s36 = int_to_ptr.vmem [resolvable:$true] %s35
      %38 = dma.hbm_to_vmem [thread:$0]  %s1, 128, %s36, [#allocation6]
    $region9: #{tpu_custom_call.1} parent=1 // pred_fallthru
      _
    // Predicated region
    $region10: #{tpu_custom_call.1} parent=1 // pred_check
      _
    $region11: #{tpu_custom_call.1} parent=1 // pred_check_branch
      %40 = sbr.rel (0) target = $region13
    $region12: #{tpu_custom_call.1} parent=1 // pred_region
      %s42 = ssub.s32 16384, 16384
      %43 = vsyncadd [#allocation6], %s42
      %s44 = sshll.u32 [#allocation7], 4
      %s45 = int_to_ptr.vmem [resolvable:$true] %s44
      %50 = dma.hbm_to_vmem [thread:$0]  %s2, 16384, %s45, [#allocation6], 512, 512, 32
    $region13: #{tpu_custom_call.1} parent=1 // pred_fallthru
      _
    // Predicated region
    $region14: #{tpu_custom_call.1} parent=1 // pred_check
      _
    $region15: #{tpu_custom_call.1} parent=1 // pred_check_branch
      %52 = sbr.rel (0) target = $region17
    $region16: #{tpu_custom_call.1} parent=1 // pred_region
      _
    $region17: #{tpu_custom_call.1} parent=1 // pred_fallthru
      _
    // Predicated region
    $region18: #{tpu_custom_call.1} parent=1 // pred_check
      _
    $region19: #{tpu_custom_call.1} parent=1 // pred_check_branch
      %54 = sbr.rel (0) target = $region21
    $region20: #{tpu_custom_call.1} parent=1 // pred_region
      %s56 = ssub.s32 2048, 2048
      %57 = vsyncadd [#allocation9], %s56
      %s58 = sshll.u32 [#allocation8], 4
      %s59 = int_to_ptr.vmem [resolvable:$true] %s58
      %64 = dma.hbm_to_vmem [thread:$0]  %s4, 2048, %s59, [#allocation9], 128, 128, 8
    $region21: #{tpu_custom_call.1} parent=1 // pred_fallthru
      _
    // Predicated region
    $region22: #{tpu_custom_call.1} parent=1 // pred_check
      _
    $region23: #{tpu_custom_call.1} parent=1 // pred_check_branch
      %66 = sbr.rel (0) target = $region25
    $region24: #{tpu_custom_call.1} parent=1 // pred_region
      _
    $region25: #{tpu_custom_call.1} parent=1 // pred_fallthru
      _
    // Predicated region
    $region26: #{tpu_custom_call.1} parent=1 // pred_check
      _
    $region27: #{tpu_custom_call.1} parent=1 // pred_check_branch
      %68 = sbr.rel (0) target = $region29
    $region28: #{tpu_custom_call.1} parent=1 // pred_region
      %69 = dma.done [#allocation3], 256
    $region29: #{tpu_custom_call.1} parent=1 // pred_fallthru
      _
    // Predicated region
    $region30: #{tpu_custom_call.1} parent=1 // pred_check
      _
    $region31: #{tpu_custom_call.1} parent=1 // pred_check_branch
      %71 = sbr.rel (0) target = $region33
    $region32: #{tpu_custom_call.1} parent=1 // pred_region
      %72 = dma.done [#allocation6], 128
    $region33: #{tpu_custom_call.1} parent=1 // pred_fallthru
      _
    // Predicated region
    $region34: #{tpu_custom_call.1} parent=1 // pred_check
      _
    $region35: #{tpu_custom_call.1} parent=1 // pred_check_branch
      %74 = sbr.rel (0) target = $region37
    $region36: #{tpu_custom_call.1} parent=1 // pred_region
      %75 = dma.done [#allocation6], 16384
    $region37: #{tpu_custom_call.1} parent=1 // pred_fallthru
      _
    // Predicated region
    $region38: #{tpu_custom_call.1} parent=1 // pred_check
      _
    $region39: #{tpu_custom_call.1} parent=1 // pred_check_branch
      %77 = sbr.rel (0) target = $region41
    $region40: #{tpu_custom_call.1} parent=1 // pred_region
      %78 = dma.done [#allocation9], 2048
    $region41: #{tpu_custom_call.1} parent=1 // pred_fallthru
      _
    %v79 = vld [vmem:[#allocation2] sm:$0xff]
    %v80 = vld [vmem:[#allocation2 + $0x8] sm:$0xff]
    %v81 = vld [vmem:[#allocation5] sm:$0xff]
    %v82 = vld [vmem:[#allocation7] sm:$0xff]
    %v83 = vld [vmem:[#allocation7 + $0x8] sm:$0xff]
    %v84 = vld [vmem:[#allocation7 + $0x10] sm:$0xff]
    %v85 = vld [vmem:[#allocation7 + $0x18] sm:$0xff]
    %v86 = vld [vmem:[#allocation7 + $0x20] sm:$0xff]
    %v87 = vld [vmem:[#allocation7 + $0x28] sm:$0xff]
    %v88 = vld [vmem:[#allocation7 + $0x30] sm:$0xff]
    %v89 = vld [vmem:[#allocation7 + $0x38] sm:$0xff]
    %v90 = vld [vmem:[#allocation7 + $0x40] sm:$0xff]
    %v91 = vld [vmem:[#allocation7 + $0x48] sm:$0xff]
    %v92 = vld [vmem:[#allocation7 + $0x50] sm:$0xff]
    %v93 = vld [vmem:[#allocation7 + $0x58] sm:$0xff]
    %v94 = vld [vmem:[#allocation7 + $0x60] sm:$0xff]
    %v95 = vld [vmem:[#allocation7 + $0x68] sm:$0xff]
    %v96 = vld [vmem:[#allocation7 + $0x70] sm:$0xff]
    %v97 = vld [vmem:[#allocation7 + $0x78] sm:$0xff]
    %v98 = vld [vmem:[#allocation7 + $0x80] sm:$0xff]
    %v99 = vld [vmem:[#allocation7 + $0x88] sm:$0xff]
    %v100 = vld [vmem:[#allocation7 + $0x90] sm:$0xff]
    %v101 = vld [vmem:[#allocation7 + $0x98] sm:$0xff]
    %v102 = vld [vmem:[#allocation7 + $0xa0] sm:$0xff]
    %v103 = vld [vmem:[#allocation7 + $0xa8] sm:$0xff]
    %v104 = vld [vmem:[#allocation7 + $0xb0] sm:$0xff]
    %v105 = vld [vmem:[#allocation7 + $0xb8] sm:$0xff]
    %v106 = vld [vmem:[#allocation7 + $0xc0] sm:$0xff]
    %v107 = vld [vmem:[#allocation7 + $0xc8] sm:$0xff]
    %v108 = vld [vmem:[#allocation7 + $0xd0] sm:$0xff]
    %v109 = vld [vmem:[#allocation7 + $0xd8] sm:$0xff]
    %v110 = vld [vmem:[#allocation7 + $0xe0] sm:$0xff]
    %v111 = vld [vmem:[#allocation7 + $0xe8] sm:$0xff]
    %v112 = vld [vmem:[#allocation7 + $0xf0] sm:$0xff]
    %v113 = vld [vmem:[#allocation7 + $0xf8] sm:$0xff]
    %v114 = vld [vmem:[#allocation7 + $0x100] sm:$0xff]
    %v115 = vld [vmem:[#allocation7 + $0x108] sm:$0xff]
    %v116 = vld [vmem:[#allocation7 + $0x110] sm:$0xff]
    %v117 = vld [vmem:[#allocation7 + $0x118] sm:$0xff]
    %v118 = vld [vmem:[#allocation7 + $0x120] sm:$0xff]
    %v119 = vld [vmem:[#allocation7 + $0x128] sm:$0xff]
    %v120 = vld [vmem:[#allocation7 + $0x130] sm:$0xff]
    %v121 = vld [vmem:[#allocation7 + $0x138] sm:$0xff]
    %v122 = vld [vmem:[#allocation7 + $0x140] sm:$0xff]
    %v123 = vld [vmem:[#allocation7 + $0x148] sm:$0xff]
    %v124 = vld [vmem:[#allocation7 + $0x150] sm:$0xff]
    %v125 = vld [vmem:[#allocation7 + $0x158] sm:$0xff]
    %v126 = vld [vmem:[#allocation7 + $0x160] sm:$0xff]
    %v127 = vld [vmem:[#allocation7 + $0x168] sm:$0xff]
    %v128 = vld [vmem:[#allocation7 + $0x170] sm:$0xff]
    %v129 = vld [vmem:[#allocation7 + $0x178] sm:$0xff]
    %v130 = vld [vmem:[#allocation7 + $0x180] sm:$0xff]
    %v131 = vld [vmem:[#allocation7 + $0x188] sm:$0xff]
    %v132 = vld [vmem:[#allocation7 + $0x190] sm:$0xff]
    %v133 = vld [vmem:[#allocation7 + $0x198] sm:$0xff]
    %v134 = vld [vmem:[#allocation7 + $0x1a0] sm:$0xff]
    %v135 = vld [vmem:[#allocation7 + $0x1a8] sm:$0xff]
    %v136 = vld [vmem:[#allocation7 + $0x1b0] sm:$0xff]
    %v137 = vld [vmem:[#allocation7 + $0x1b8] sm:$0xff]
    %v138 = vld [vmem:[#allocation7 + $0x1c0] sm:$0xff]
    %v139 = vld [vmem:[#allocation7 + $0x1c8] sm:$0xff]
    %v140 = vld [vmem:[#allocation7 + $0x1d0] sm:$0xff]
    %v141 = vld [vmem:[#allocation7 + $0x1d8] sm:$0xff]
    %v142 = vld [vmem:[#allocation7 + $0x1e0] sm:$0xff]
    %v143 = vld [vmem:[#allocation7 + $0x1e8] sm:$0xff]
    %v144 = vld [vmem:[#allocation7 + $0x1f0] sm:$0xff]
    %v145 = vld [vmem:[#allocation7 + $0x1f8] sm:$0xff]
    %v146 = vld [vmem:[#allocation7 + $0x200] sm:$0xff]
    %v147 = vld [vmem:[#allocation7 + $0x208] sm:$0xff]
    %v148 = vld [vmem:[#allocation7 + $0x210] sm:$0xff]
    %v149 = vld [vmem:[#allocation7 + $0x218] sm:$0xff]
    %v150 = vld [vmem:[#allocation7 + $0x220] sm:$0xff]
    %v151 = vld [vmem:[#allocation7 + $0x228] sm:$0xff]
    %v152 = vld [vmem:[#allocation7 + $0x230] sm:$0xff]
    %v153 = vld [vmem:[#allocation7 + $0x238] sm:$0xff]
    %v154 = vld [vmem:[#allocation7 + $0x240] sm:$0xff]
    %v155 = vld [vmem:[#allocation7 + $0x248] sm:$0xff]
    %v156 = vld [vmem:[#allocation7 + $0x250] sm:$0xff]
    %v157 = vld [vmem:[#allocation7 + $0x258] sm:$0xff]
    %v158 = vld [vmem:[#allocation7 + $0x260] sm:$0xff]
    %v159 = vld [vmem:[#allocation7 + $0x268] sm:$0xff]
    %v160 = vld [vmem:[#allocation7 + $0x270] sm:$0xff]
    %v161 = vld [vmem:[#allocation7 + $0x278] sm:$0xff]
    %v162 = vld [vmem:[#allocation7 + $0x280] sm:$0xff]
    %v163 = vld [vmem:[#allocation7 + $0x288] sm:$0xff]
    %v164 = vld [vmem:[#allocation7 + $0x290] sm:$0xff]
    %v165 = vld [vmem:[#allocation7 + $0x298] sm:$0xff]
    %v166 = vld [vmem:[#allocation7 + $0x2a0] sm:$0xff]
    %v167 = vld [vmem:[#allocation7 + $0x2a8] sm:$0xff]
    %v168 = vld [vmem:[#allocation7 + $0x2b0] sm:$0xff]
    %v169 = vld [vmem:[#allocation7 + $0x2b8] sm:$0xff]
    %v170 = vld [vmem:[#allocation7 + $0x2c0] sm:$0xff]
    %v171 = vld [vmem:[#allocation7 + $0x2c8] sm:$0xff]
    %v172 = vld [vmem:[#allocation7 + $0x2d0] sm:$0xff]
    %v173 = vld [vmem:[#allocation7 + $0x2d8] sm:$0xff]
    %v174 = vld [vmem:[#allocation7 + $0x2e0] sm:$0xff]
    %v175 = vld [vmem:[#allocation7 + $0x2e8] sm:$0xff]
    %v176 = vld [vmem:[#allocation7 + $0x2f0] sm:$0xff]
    %v177 = vld [vmem:[#allocation7 + $0x2f8] sm:$0xff]
    %v178 = vld [vmem:[#allocation7 + $0x300] sm:$0xff]
    %v179 = vld [vmem:[#allocation7 + $0x308] sm:$0xff]
    %v180 = vld [vmem:[#allocation7 + $0x310] sm:$0xff]
    %v181 = vld [vmem:[#allocation7 + $0x318] sm:$0xff]
    %v182 = vld [vmem:[#allocation7 + $0x320] sm:$0xff]
    %v183 = vld [vmem:[#allocation7 + $0x328] sm:$0xff]
    %v184 = vld [vmem:[#allocation7 + $0x330] sm:$0xff]
    %v185 = vld [vmem:[#allocation7 + $0x338] sm:$0xff]
    %v186 = vld [vmem:[#allocation7 + $0x340] sm:$0xff]
    %v187 = vld [vmem:[#allocation7 + $0x348] sm:$0xff]
    %v188 = vld [vmem:[#allocation7 + $0x350] sm:$0xff]
    %v189 = vld [vmem:[#allocation7 + $0x358] sm:$0xff]
    %v190 = vld [vmem:[#allocation7 + $0x360] sm:$0xff]
    %v191 = vld [vmem:[#allocation7 + $0x368] sm:$0xff]
    %v192 = vld [vmem:[#allocation7 + $0x370] sm:$0xff]
    %v193 = vld [vmem:[#allocation7 + $0x378] sm:$0xff]
    %v194 = vld [vmem:[#allocation7 + $0x380] sm:$0xff]
    %v195 = vld [vmem:[#allocation7 + $0x388] sm:$0xff]
    %v196 = vld [vmem:[#allocation7 + $0x390] sm:$0xff]
    %v197 = vld [vmem:[#allocation7 + $0x398] sm:$0xff]
    %v198 = vld [vmem:[#allocation7 + $0x3a0] sm:$0xff]
    %v199 = vld [vmem:[#allocation7 + $0x3a8] sm:$0xff]
    %v200 = vld [vmem:[#allocation7 + $0x3b0] sm:$0xff]
    %v201 = vld [vmem:[#allocation7 + $0x3b8] sm:$0xff]
    %v202 = vld [vmem:[#allocation7 + $0x3c0] sm:$0xff]
    %v203 = vld [vmem:[#allocation7 + $0x3c8] sm:$0xff]
    %v204 = vld [vmem:[#allocation7 + $0x3d0] sm:$0xff]
    %v205 = vld [vmem:[#allocation7 + $0x3d8] sm:$0xff]
    %v206 = vld [vmem:[#allocation7 + $0x3e0] sm:$0xff]
    %v207 = vld [vmem:[#allocation7 + $0x3e8] sm:$0xff]
    %v208 = vld [vmem:[#allocation7 + $0x3f0] sm:$0xff]
    %v209 = vld [vmem:[#allocation7 + $0x3f8] sm:$0xff]
    %v210 = vld [vmem:[%s3] sm:$0xf]
    %v212 = vlaneseq
    %v213 = vshrl.u32 %v212, 7
    %v214 = vsub.s32 0, %v213
    %v215 = vrot.slane %v210, %v214
    %v216 = vlaneseq
    %v217 = vshrl.u32 %v216, 7
    %v218 = vsub.s32 1, %v217
    %v219 = vrot.slane %v210, %v218
    %v220 = vlaneseq
    %v221 = vshrl.u32 %v220, 7
    %v222 = vsub.s32 2, %v221
    %v223 = vrot.slane %v210, %v222
    %v224 = vlaneseq
    %v225 = vshrl.u32 %v224, 7
    %v226 = vsub.s32 3, %v225
    %v227 = vrot.slane %v210, %v226
    %232 = vmatprep.subr.mxu0 %v83
    %233 = vmatpush1.msra.mxu0 %v82
    %234 = vmatprep.subr.mxu0 %v87
    %235 = vmatpush1.msra.mxu0 %v86
    %236 = vmatprep.subr.mxu0 %v91
    %237 = vmatpush1.msra.mxu0 %v90
    %238 = vmatprep.subr.mxu0 %v95
    %239 = vmatpush1.msra.mxu0 %v94
    %240 = vmatprep.subr.mxu0 %v99
    %241 = vmatpush1.msra.mxu0 %v98
    %242 = vmatprep.subr.mxu0 %v103
    %243 = vmatpush1.msra.mxu0 %v102
    %244 = vmatprep.subr.mxu0 %v107
    %245 = vmatpush1.msra.mxu0 %v106
    %246 = vmatprep.subr.mxu0 %v111
    %247 = vmatpush1.msra.mxu0 %v110
    %248 = vmatprep.subr.mxu0 %v115
    %249 = vmatpush1.msra.mxu0 %v114
    %250 = vmatprep.subr.mxu0 %v119
    %251 = vmatpush1.msra.mxu0 %v118
    %252 = vmatprep.subr.mxu0 %v123
    %253 = vmatpush1.msra.mxu0 %v122
    %254 = vmatprep.subr.mxu0 %v127
    %255 = vmatpush1.msra.mxu0 %v126
    %256 = vmatprep.subr.mxu0 %v131
    %257 = vmatpush1.msra.mxu0 %v130
    %258 = vmatprep.subr.mxu0 %v135
    %259 = vmatpush1.msra.mxu0 %v134
    %260 = vmatprep.subr.mxu0 %v139
    %261 = vmatpush1.msra.mxu0 %v138
    %262 = vmatprep.subr.mxu0 %v143
    %263 = vmatpush1.msra.mxu0 %v142
    %264 = vmatprep.subr.mxu0 %v147
    %265 = vmatpush1.msra.mxu0 %v146
    %266 = vmatprep.subr.mxu0 %v151
    %267 = vmatpush1.msra.mxu0 %v150
    %268 = vmatprep.subr.mxu0 %v155
    %269 = vmatpush1.msra.mxu0 %v154
    %270 = vmatprep.subr.mxu0 %v159
    %271 = vmatpush1.msra.mxu0 %v158
    %272 = vmatprep.subr.mxu0 %v163
    %273 = vmatpush1.msra.mxu0 %v162
    %274 = vmatprep.subr.mxu0 %v167
    %275 = vmatpush1.msra.mxu0 %v166
    %276 = vmatprep.subr.mxu0 %v171
    %277 = vmatpush1.msra.mxu0 %v170
    %278 = vmatprep.subr.mxu0 %v175
    %279 = vmatpush1.msra.mxu0 %v174
    %280 = vmatprep.subr.mxu0 %v179
    %281 = vmatpush1.msra.mxu0 %v178
    %282 = vmatprep.subr.mxu0 %v183
    %283 = vmatpush1.msra.mxu0 %v182
    %284 = vmatprep.subr.mxu0 %v187
    %285 = vmatpush1.msra.mxu0 %v186
    %286 = vmatprep.subr.mxu0 %v191
    %287 = vmatpush1.msra.mxu0 %v190
    %288 = vmatprep.subr.mxu0 %v195
    %289 = vmatpush1.msra.mxu0 %v194
    %290 = vmatprep.subr.mxu0 %v199
    %291 = vmatpush1.msra.mxu0 %v198
    %292 = vmatprep.subr.mxu0 %v203
    %293 = vmatpush1.msra.mxu0 %v202
    %294 = vmatprep.subr.mxu0 %v207
    %295 = vmatpush1.msra.mxu0 %v206
    %296 = vmatprep.mubr.f32.mxu0 %v80
    %297 = vmatmul.mubr.f32.gmra.mrb[0].mxu0 %v79
    %v298 = vpop.f32.mrb[0].mxu0
    %v299 = vadd.f32 %v215, %v298
    %v300 = vpop.f32.mrb[0].mxu0
    %v301 = vadd.f32 %v219, %v300
    %302 = vdwg.mxu0
    %303 = vmatprep.subr.mxu0 %v85
    %304 = vmatpush1.msra.mxu0 %v84
    %305 = vmatprep.subr.mxu0 %v89
    %306 = vmatpush1.msra.mxu0 %v88
    %307 = vmatprep.subr.mxu0 %v93
    %308 = vmatpush1.msra.mxu0 %v92
    %309 = vmatprep.subr.mxu0 %v97
    %310 = vmatpush1.msra.mxu0 %v96
    %311 = vmatprep.subr.mxu0 %v101
    %312 = vmatpush1.msra.mxu0 %v100
    %313 = vmatprep.subr.mxu0 %v105
    %314 = vmatpush1.msra.mxu0 %v104
    %315 = vmatprep.subr.mxu0 %v109
    %316 = vmatpush1.msra.mxu0 %v108
    %317 = vmatprep.subr.mxu0 %v113
    %318 = vmatpush1.msra.mxu0 %v112
    %319 = vmatprep.subr.mxu0 %v117
    %320 = vmatpush1.msra.mxu0 %v116
    %321 = vmatprep.subr.mxu0 %v121
    %322 = vmatpush1.msra.mxu0 %v120
    %323 = vmatprep.subr.mxu0 %v125
    %324 = vmatpush1.msra.mxu0 %v124
    %325 = vmatprep.subr.mxu0 %v129
    %326 = vmatpush1.msra.mxu0 %v128
    %327 = vmatprep.subr.mxu0 %v133
    %328 = vmatpush1.msra.mxu0 %v132
    %329 = vmatprep.subr.mxu0 %v137
    %330 = vmatpush1.msra.mxu0 %v136
    %331 = vmatprep.subr.mxu0 %v141
    %332 = vmatpush1.msra.mxu0 %v140
    %333 = vmatprep.subr.mxu0 %v145
    %334 = vmatpush1.msra.mxu0 %v144
    %335 = vmatprep.subr.mxu0 %v149
    %336 = vmatpush1.msra.mxu0 %v148
    %337 = vmatprep.subr.mxu0 %v153
    %338 = vmatpush1.msra.mxu0 %v152
    %339 = vmatprep.subr.mxu0 %v157
    %340 = vmatpush1.msra.mxu0 %v156
    %341 = vmatprep.subr.mxu0 %v161
    %342 = vmatpush1.msra.mxu0 %v160
    %343 = vmatprep.subr.mxu0 %v165
    %344 = vmatpush1.msra.mxu0 %v164
    %345 = vmatprep.subr.mxu0 %v169
    %346 = vmatpush1.msra.mxu0 %v168
    %347 = vmatprep.subr.mxu0 %v173
    %348 = vmatpush1.msra.mxu0 %v172
    %349 = vmatprep.subr.mxu0 %v177
    %350 = vmatpush1.msra.mxu0 %v176
    %351 = vmatprep.subr.mxu0 %v181
    %352 = vmatpush1.msra.mxu0 %v180
    %353 = vmatprep.subr.mxu0 %v185
    %354 = vmatpush1.msra.mxu0 %v184
    %355 = vmatprep.subr.mxu0 %v189
    %356 = vmatpush1.msra.mxu0 %v188
    %357 = vmatprep.subr.mxu0 %v193
    %358 = vmatpush1.msra.mxu0 %v192
    %359 = vmatprep.subr.mxu0 %v197
    %360 = vmatpush1.msra.mxu0 %v196
    %361 = vmatprep.subr.mxu0 %v201
    %362 = vmatpush1.msra.mxu0 %v200
    %363 = vmatprep.subr.mxu0 %v205
    %364 = vmatpush1.msra.mxu0 %v204
    %365 = vmatprep.subr.mxu0 %v209
    %366 = vmatpush1.msra.mxu0 %v208
    %367 = vmatprep.mubr.f32.mxu0 %v80
    %368 = vmatmul.mubr.f32.gmra.mrb[0].mxu0 %v79
    %v369 = vpop.f32.mrb[0].mxu0
    %v370 = vadd.f32 %v223, %v369
    %v371 = vpop.f32.mrb[0].mxu0
    %v372 = vadd.f32 %v227, %v371
    %373 = vdwg.mxu0
    %v374 = vxor.u32 %v299, 2147483648
    %v375 = vxor.u32 %v301, 2147483648
    %v376 = vxor.u32 %v370, 2147483648
    %v377 = vmul.f32 %v374, 1.442695
    %v378 = vpow.pop %v377
    %v379 = vmul.f32 %v375, 1.442695
    %v380 = vpow.pop %v379
    %v381 = vmul.f32 %v376, 1.442695
    %v382 = vpow.pop %v381
    %v383 = vadd.f32 %v378, 1.0
    %v384 = vadd.f32 %v380, 1.0
    %v385 = vadd.f32 %v382, 1.0
    %v386 = vrcp.pop %v383
    %v387 = vmul.f32 1.0, %v386
    %v388 = vrcp.pop %v384
    %v389 = vmul.f32 1.0, %v388
    %v390 = vrcp.pop %v385
    %v391 = vmul.f32 1.0, %v390
    %v392 = vtanh.pop %v372
    %v393 = vmul.f32 %v389, %v81
    %v394 = vmul.f32 %v387, %v392
    %v395 = vadd.f32 %v393, %v394
    %v396 = vtanh.pop %v395
    %v397 = vmul.f32 %v391, %v396
    %398 = vst [vmem:[#allocation13] sm:$0xff] %v395
    %399 = vst [vmem:[#allocation11] sm:$0xff] %v397
    %v400 = vld [vmem:[#allocation8] sm:$0xff]
    %v401 = vld [vmem:[#allocation8 + $0x8] sm:$0xff]
    %v402 = vld [vmem:[#allocation8 + $0x10] sm:$0xff]
    %v403 = vld [vmem:[#allocation8 + $0x18] sm:$0xff]
    %v404 = vld [vmem:[#allocation8 + $0x20] sm:$0xff]
    %v405 = vld [vmem:[#allocation8 + $0x28] sm:$0xff]
    %v406 = vld [vmem:[#allocation8 + $0x30] sm:$0xff]
    %v407 = vld [vmem:[#allocation8 + $0x38] sm:$0xff]
    %v408 = vld [vmem:[#allocation8 + $0x40] sm:$0xff]
    %v409 = vld [vmem:[#allocation8 + $0x48] sm:$0xff]
    %v410 = vld [vmem:[#allocation8 + $0x50] sm:$0xff]
    %v411 = vld [vmem:[#allocation8 + $0x58] sm:$0xff]
    %v412 = vld [vmem:[#allocation8 + $0x60] sm:$0xff]
    %v413 = vld [vmem:[#allocation8 + $0x68] sm:$0xff]
    %v414 = vld [vmem:[#allocation8 + $0x70] sm:$0xff]
    %v415 = vld [vmem:[#allocation8 + $0x78] sm:$0xff]
    %v416 = vld [vmem:[%s5] sm:$0x1]
    %v418 = vlaneseq
    %v419 = vshrl.u32 %v418, 7
    %v420 = vsub.s32 0, %v419
    %v421 = vrot.slane %v416, %v420
    %423 = vmatprep.subr.mxu0 0.0
    %424 = vmatpush1.msra.mxu0 %v400
    %425 = vmatprep.subr.mxu0 0.0
    %426 = vmatpush1.msra.mxu0 %v401
    %427 = vmatprep.subr.mxu0 0.0
    %428 = vmatpush1.msra.mxu0 %v402
    %429 = vmatprep.subr.mxu0 0.0
    %430 = vmatpush1.msra.mxu0 %v403
    %431 = vmatprep.subr.mxu0 0.0
    %432 = vmatpush1.msra.mxu0 %v404
    %433 = vmatprep.subr.mxu0 0.0
    %434 = vmatpush1.msra.mxu0 %v405
    %435 = vmatprep.subr.mxu0 0.0
    %436 = vmatpush1.msra.mxu0 %v406
    %437 = vmatprep.subr.mxu0 0.0
    %438 = vmatpush1.msra.mxu0 %v407
    %439 = vmatprep.subr.mxu0 0.0
    %440 = vmatpush1.msra.mxu0 %v408
    %441 = vmatprep.subr.mxu0 0.0
    %442 = vmatpush1.msra.mxu0 %v409
    %443 = vmatprep.subr.mxu0 0.0
    %444 = vmatpush1.msra.mxu0 %v410
    %445 = vmatprep.subr.mxu0 0.0
    %446 = vmatpush1.msra.mxu0 %v411
    %447 = vmatprep.subr.mxu0 0.0
    %448 = vmatpush1.msra.mxu0 %v412
    %449 = vmatprep.subr.mxu0 0.0
    %450 = vmatpush1.msra.mxu0 %v413
    %451 = vmatprep.subr.mxu0 0.0
    %452 = vmatpush1.msra.mxu0 %v414
    %453 = vmatprep.subr.mxu0 0.0
    %454 = vmatpush1.msra.mxu0 %v415
    %455 = vmatprep.subr.mxu0 0.0
    %456 = vmatpush1.msra.mxu0 0.0
    %457 = vmatprep.subr.mxu0 0.0
    %458 = vmatpush1.msra.mxu0 0.0
    %459 = vmatprep.subr.mxu0 0.0
    %460 = vmatpush1.msra.mxu0 0.0
    %461 = vmatprep.subr.mxu0 0.0
    %462 = vmatpush1.msra.mxu0 0.0
    %463 = vmatprep.subr.mxu0 0.0
    %464 = vmatpush1.msra.mxu0 0.0
    %465 = vmatprep.subr.mxu0 0.0
    %466 = vmatpush1.msra.mxu0 0.0
    %467 = vmatprep.subr.mxu0 0.0
    %468 = vmatpush1.msra.mxu0 0.0
    %469 = vmatprep.subr.mxu0 0.0
    %470 = vmatpush1.msra.mxu0 0.0
    %471 = vmatprep.subr.mxu0 0.0
    %472 = vmatpush1.msra.mxu0 0.0
    %473 = vmatprep.subr.mxu0 0.0
    %474 = vmatpush1.msra.mxu0 0.0
    %475 = vmatprep.subr.mxu0 0.0
    %476 = vmatpush1.msra.mxu0 0.0
    %477 = vmatprep.subr.mxu0 0.0
    %478 = vmatpush1.msra.mxu0 0.0
    %479 = vmatprep.subr.mxu0 0.0
    %480 = vmatpush1.msra.mxu0 0.0
    %481 = vmatprep.subr.mxu0 0.0
    %482 = vmatpush1.msra.mxu0 0.0
    %483 = vmatprep.subr.mxu0 0.0
    %484 = vmatpush1.msra.mxu0 0.0
    %485 = vmatprep.subr.mxu0 0.0
    %486 = vmatpush1.msra.mxu0 0.0
    %487 = vmatprep.mubr.f32.mxu0 0.0
    %488 = vmatmul.mubr.f32.gmra.mrb[0].mxu0 %v397
    %v489 = vpop.f32.mrb[0].mxu0
    %v490 = vadd.f32 %v421, %v489
    %v491 = vpop.f32.mrb[0].mxu0
    %492 = vdwg.mxu0
    %493 = vst [vmem:[#allocation10] sm:$0xff] %v490
    // Predicated region
    $region42: #{tpu_custom_call.1} parent=1 // pred_check
      _
    $region43: #{tpu_custom_call.1} parent=1 // pred_check_branch
      %495 = sbr.rel (0) target = $region45
    $region44: #{tpu_custom_call.1} parent=1 // pred_region
      %s497 = ssub.s32 128, 128
      %498 = vsyncadd [#allocation4], %s497
      %s500 = sshll.u32 [#allocation10], 4
      %s501 = int_to_ptr.vmem [resolvable:$true] %s500
      %503 = dma.vmem_to_hbm [thread:$0]  %s501, 128, %s6, [#allocation4]
    $region45: #{tpu_custom_call.1} parent=1 // pred_fallthru
      _
    // Predicated region
    $region46: #{tpu_custom_call.1} parent=1 // pred_check
      _
    $region47: #{tpu_custom_call.1} parent=1 // pred_check_branch
      %505 = sbr.rel (0) target = $region49
    $region48: #{tpu_custom_call.1} parent=1 // pred_region
      %s507 = ssub.s32 128, 128
      %508 = vsyncadd [#allocation12], %s507
      %s510 = sshll.u32 [#allocation11], 4
      %s511 = int_to_ptr.vmem [resolvable:$true] %s510
      %513 = dma.vmem_to_hbm [thread:$0]  %s511, 128, %s7, [#allocation12]
    $region49: #{tpu_custom_call.1} parent=1 // pred_fallthru
      _
    // Predicated region
    $region50: #{tpu_custom_call.1} parent=1 // pred_check
      _
    $region51: #{tpu_custom_call.1} parent=1 // pred_check_branch
      %515 = sbr.rel (0) target = $region53
    $region52: #{tpu_custom_call.1} parent=1 // pred_region
      %s517 = ssub.s32 128, 128
      %518 = vsyncadd [#allocation12], %s517
      %s520 = sshll.u32 [#allocation13], 4
      %s521 = int_to_ptr.vmem [resolvable:$true] %s520
      %523 = dma.vmem_to_hbm [thread:$0]  %s521, 128, %s8, [#allocation12]
    $region53: #{tpu_custom_call.1} parent=1 // pred_fallthru
      _
    // Predicated region
    $region54: #{tpu_custom_call.1} parent=1 // pred_check
      _
    $region55: #{tpu_custom_call.1} parent=1 // pred_check_branch
      %525 = sbr.rel (0) target = $region57
    $region56: #{tpu_custom_call.1} parent=1 // pred_region
      %526 = dma.done [#allocation4], 128
    $region57: #{tpu_custom_call.1} parent=1 // pred_fallthru
      _
    // Predicated region
    $region58: #{tpu_custom_call.1} parent=1 // pred_check
      _
    $region59: #{tpu_custom_call.1} parent=1 // pred_check_branch
      %528 = sbr.rel (0) target = $region61
    $region60: #{tpu_custom_call.1} parent=1 // pred_region
      %529 = dma.done [#allocation12], 128
    $region61: #{tpu_custom_call.1} parent=1 // pred_fallthru
      _
    // Predicated region
    $region62: #{tpu_custom_call.1} parent=1 // pred_check
      _
    $region63: #{tpu_custom_call.1} parent=1 // pred_check_branch
      %531 = sbr.rel (0) target = $region65
    $region64: #{tpu_custom_call.1} parent=1 // pred_region
      %532 = dma.done [#allocation12], 128
    $region65: #{tpu_custom_call.1} parent=1 // pred_fallthru
      _
    %533 = vsyncpa [#allocation3], 1
    %534 = vsyncpa [#allocation6], 1
    %535 = vsyncpa [#allocation9], 1
    %536 = vsyncpa [#allocation4], 1
    %537 = vsyncpa [#allocation12], 1

</llo_original>
